<compile_context>
chip_gen: v5e
topology: v5e:2x2
jax: 0.10.0
libtpu: 0.0.40
codegen_flags: <defaults>
</compile_context>

<pallas_src>
import functools
import math

import jax
import jax.numpy as jnp
from jax import lax
from jax.experimental import pallas as pl
from jax.experimental.pallas import tpu as pltpu


def encoder_kernel(x_ref, p_ref, eps_ref, out_ref, *, H, L):
    """Whole encoder hot path in one kernel.

    x_ref   : (B, F)      flattened input
    p_ref   : (5H+5, F)   packed parameter slab (row layout: see pack_params)
    eps_ref : (B, L)      N(0,1) noise for the reparameterization trick
    out_ref : (B, 3L)     output slab [z_mean | z_log_var | z]
    """
    x = x_ref[...]                                            # (B, F)

    # ---- Linear(F -> H): the only big contraction; keep it on the MXU. ----
    # w1 is stored transposed (H, F) so its minor dim stays lane-dense; the
    # contraction runs over dim 1 of both operands (NT matmul).
    w1_t = p_ref[0:H, :]                                      # (H, F)
    h = lax.dot_general(x, w1_t, (((1,), (1,)), ((), ())),
                        preferred_element_type=jnp.float32)   # (B, H)
    h = h + p_ref[5 * H + 0:5 * H + 1, 0:H]                   # + b1, (1,H) bcast

    def leaky(v):                                             # nn.LeakyReLU(0.2)
        return jnp.where(v > 0, v, 0.2 * v)

    def vpu_linear(hin, w, b):
        # Tiny contraction (Hin = 4): unrolled broadcasted multiply-adds on
        # the VPU instead of a dependency-chained MXU push/pop round-trip.
        acc = b + hin[:, 0:1] * w[0:1, :]
        for k in range(1, w.shape[0]):
            acc = acc + hin[:, k:k + 1] * w[k:k + 1, :]
        return acc

    # ---- 3x [Linear(H -> H), LeakyReLU(0.2)] ----
    for layer in range(3):
        w = p_ref[(1 + layer) * H:(2 + layer) * H, 0:H]       # (H, H)
        b = p_ref[5 * H + 1 + layer:5 * H + 2 + layer, 0:H]   # (1, H)
        h = leaky(vpu_linear(h, w, b))

    # ---- fused heads: mean and log-var as one (H, 2L) VPU linear ----
    wh = p_ref[4 * H:5 * H, 0:2 * L]                          # (H, 2L)
    bh = p_ref[5 * H + 4:5 * H + 5, 0:2 * L]                  # (1, 2L)
    mv = vpu_linear(h, wh, bh)                                # (B, 2L) = [mean | logvar]

    z_mean = mv[:, 0:L]
    z_log_var = mv[:, L:2 * L]
    z = z_mean + eps_ref[...] * jnp.exp(0.5 * z_log_var)      # reparameterization

    # Lane-dense output slab, stored without any concatenation.
    out_ref[:, 0:2 * L] = mv                                  # [z_mean | z_log_var
    out_ref[:, 2 * L:3 * L] = z                               #  | z ]


def pack_params(params, n_hidden, n_latent):
    """One-time packing of all weights/biases into a single (5H+5, F) f32 slab.

    Row layout:
      rows [0, H)        : w1^T                 (H, F)
      rows [H, 2H)       : w2                   (H, H)   in cols [0, H)
      rows [2H, 3H)      : w3                   (H, H)   in cols [0, H)
      rows [3H, 4H)      : w4                   (H, H)   in cols [0, H)
      rows [4H, 5H)      : [wm | wv]            (H, 2L)  in cols [0, 2L)
      row  5H + i (i<4)  : b_{i+1}              in cols [0, H)
      row  5H + 4        : [bm | bv]            in cols [0, 2L)
    """
    H, L = n_hidden, n_latent
    F = params["w1"].shape[0]
    slab = jnp.zeros((5 * H + 5, F), jnp.float32)
    slab = slab.at[0:H, :].set(params["w1"].T)
    slab = slab.at[1 * H:2 * H, 0:H].set(params["w2"])
    slab = slab.at[2 * H:3 * H, 0:H].set(params["w3"])
    slab = slab.at[3 * H:4 * H, 0:H].set(params["w4"])
    slab = slab.at[4 * H:5 * H, 0:2 * L].set(
        jnp.concatenate([params["wm"], params["wv"]], axis=1))
    slab = slab.at[5 * H + 0, 0:H].set(params["b1"][0])
    slab = slab.at[5 * H + 1, 0:H].set(params["b2"][0])
    slab = slab.at[5 * H + 2, 0:H].set(params["b3"][0])
    slab = slab.at[5 * H + 3, 0:H].set(params["b4"][0])
    slab = slab.at[5 * H + 4, 0:2 * L].set(
        jnp.concatenate([params["bm"], params["bv"]], axis=1)[0])
    return slab


def encoder_forward(x, param_slab, eps, *, n_hidden, n_latent):
    """x: (B, C, H, W) float. param_slab: output of pack_params.
    eps: (B, L) float32 standard-normal noise (torch.randn analogue, supplied
    externally so the kernel is deterministic).
    Returns (z, z_mean, z_log_var), each (B, L) float32."""
    H, L = n_hidden, n_latent
    B = x.shape[0]
    x_flat = x.reshape(B, -1).astype(jnp.float32)   # torch.flatten(x, 1).float()

    # B=2 / H=4 / L=8: everything fits a single VMEM block, so run gridless
    # (three input DMAs, one output DMA, no pipeline bookkeeping).
    # TODO(synk): at realistic VAE sizes (F ~ 1e5+, H >= 512) add (a) a batch
    # grid axis with >=2 "parallel" steps (v7x has 2 TensorCores), (b) a
    # K-tiled "arbitrary" reduction axis with an f32 VMEM accumulator sized for
    # v7x's 64 MiB VMEM, (c) pipeline_mode=pl.Buffered(1) on the grid-invariant
    # weight slab, and (d) vmem_limit_bytes (v5e scoped default is only 16 MiB).
    call = pl.pallas_call(
        functools.partial(encoder_kernel, H=H, L=L),
        in_specs=[pl.BlockSpec(memory_space=pltpu.MemorySpace.VMEM)] * 3,
        out_specs=pl.BlockSpec(memory_space=pltpu.MemorySpace.VMEM),
        out_shape=jax.ShapeDtypeStruct((B, 3 * L), jnp.float32),
    )
    out = call(x_flat, param_slab, eps)
    z_mean = out[:, 0 * L:1 * L]
    z_log_var = out[:, 1 * L:2 * L]
    z = out[:, 2 * L:3 * L]
    return z, z_mean, z_log_var


def init_params(key, n_input_features, n_hidden=4, n_latent=8):
    """Deterministic parameter init mirroring the torch module's shapes.
    Weights stored as (in, out); biases as (1, out)."""
    keys = jax.random.split(key, 12)

    def torch_default(kw, kb, fan_in, fan_out):
        bound = 1.0 / math.sqrt(fan_in)
        w = jax.random.uniform(kw, (fan_in, fan_out), jnp.float32, -bound, bound)
        b = jax.random.uniform(kb, (1, fan_out), jnp.float32, -bound, bound)
        return w, b

    def kaiming_w_default_b(kw, kb, fan_in, fan_out):
        # nn.init.kaiming_uniform_ (a=0, fan_in, gain=sqrt(2)) on weight;
        # bias keeps torch default U(-1/sqrt(fan_in), 1/sqrt(fan_in)).
        bound_w = math.sqrt(6.0 / fan_in)
        w = jax.random.uniform(kw, (fan_in, fan_out), jnp.float32, -bound_w, bound_w)
        bound_b = 1.0 / math.sqrt(fan_in)
        b = jax.random.uniform(kb, (1, fan_out), jnp.float32, -bound_b, bound_b)
        return w, b

    p = {}
    p["w1"], p["b1"] = torch_default(keys[0], keys[1], n_input_features, n_hidden)
    p["w2"], p["b2"] = kaiming_w_default_b(keys[2], keys[3], n_hidden, n_hidden)
    p["w3"], p["b3"] = kaiming_w_default_b(keys[4], keys[5], n_hidden, n_hidden)
    p["w4"], p["b4"] = kaiming_w_default_b(keys[6], keys[7], n_hidden, n_hidden)
    p["wm"], p["bm"] = torch_default(keys[8], keys[9], n_hidden, n_latent)
    p["wv"], p["bv"] = torch_default(keys[10], keys[11], n_hidden, n_latent)
    return p


def reference_forward(x, params, eps):
    """Pure-JAX reference (full-f32 matmul precision) for correctness check."""
    mm = functools.partial(jnp.dot, precision=jax.lax.Precision.HIGHEST)
    B = x.shape[0]
    h = x.reshape(B, -1).astype(jnp.float32)
    h = mm(h, params["w1"]) + params["b1"]
    for k in ("2", "3", "4"):
        h = mm(h, params["w" + k]) + params["b" + k]
        h = jnp.where(h > 0, h, 0.2 * h)
    z_mean = mm(h, params["wm"]) + params["bm"]
    z_log_var = mm(h, params["wv"]) + params["bv"]
    z = z_mean + eps * jnp.exp(0.5 * z_log_var)
    return z, z_mean, z_log_var


if __name__ == "__main__":
    key = jax.random.PRNGKey(0)
    k_x, k_p, k_eps = jax.random.split(key, 3)

    # Small, module-consistent shapes: batch=2, C=4, spatial=16 -> F=1024.
    B, C, Himg, Wimg = 2, 4, 16, 16
    n_input_features = C * Himg * Wimg          # 1024
    n_hidden, n_latent = 4, 8

    x = jax.random.normal(k_x, (B, C, Himg, Wimg), dtype=jnp.float32)
    params = init_params(k_p, n_input_features, n_hidden, n_latent)
    param_slab = pack_params(params, n_hidden, n_latent)   # one-time fusion
    # eps ~ N(0,1), generated outside the kernel (deterministic torch.randn analogue).
    eps = jax.random.normal(k_eps, (B, n_latent), dtype=jnp.float32)

    z, z_mean, z_log_var = encoder_forward(
        x, param_slab, eps, n_hidden=n_hidden, n_latent=n_latent)
    jax.block_until_ready((z, z_mean, z_log_var))

    z_ref, m_ref, v_ref = reference_forward(x, params, eps)
    # 2e-4 tolerance: the in-kernel F=1024 contraction runs on the MXU, whose
    # f32 pass structure can differ slightly from the XLA HIGHEST-precision dot.
    assert jnp.allclose(z_mean, m_ref, atol=2e-4, rtol=2e-4)
    assert jnp.allclose(z_log_var, v_ref, atol=2e-4, rtol=2e-4)
    assert jnp.allclose(z, z_ref, atol=2e-4, rtol=2e-4)

    print("KERNEL_OK")
</pallas_src>

<mosaic_0001>
module attributes {stable_mosaic.version = 11 : i64} {
  func.func @encoder_kernel(%arg0: memref<2x1024xf32, #tpu.memory_space<vmem>>, %arg1: memref<25x1024xf32, #tpu.memory_space<vmem>>, %arg2: memref<2x8xf32, #tpu.memory_space<vmem>>, %arg3: memref<2x24xf32, #tpu.memory_space<vmem>>) attributes {dimension_semantics = [], scalar_prefetch = 0 : i64, scratch_operands = 0 : i64, tpu.core_type = #tpu.core_type<tc>} {
    %c0 = arith.constant 0 : index
    %c0_0 = arith.constant 0 : index
    %0 = vector.load %arg0[%c0, %c0_0] : memref<2x1024xf32, #tpu.memory_space<vmem>>, vector<2x1024xf32>
    %c0_1 = arith.constant 0 : index
    %c0_2 = arith.constant 0 : index
    %1 = vector.load %arg1[%c0_1, %c0_2] : memref<25x1024xf32, #tpu.memory_space<vmem>>, vector<4x1024xf32>
    %cst = arith.constant dense<0.000000e+00> : vector<2x4xf32>
    %2 = tpu.matmul %0, %1, %cst {dimension_numbers = #tpu.dot_dimension_numbers<[1], [1], [0], [0], [0, 0, 1, 0], [], []>} : vector<2x1024xf32>, vector<4x1024xf32>, vector<2x4xf32> -> vector<2x4xf32>
    %c20 = arith.constant 20 : index
    %c0_3 = arith.constant 0 : index
    %3 = vector.load %arg1[%c20, %c0_3] : memref<25x1024xf32, #tpu.memory_space<vmem>>, vector<1x4xf32>
    %4 = vector.broadcast %3 : vector<1x4xf32> to vector<2x4xf32>
    %5 = arith.addf %2, %4 : vector<2x4xf32>
    %c4 = arith.constant 4 : index
    %c0_4 = arith.constant 0 : index
    %6 = vector.load %arg1[%c4, %c0_4] : memref<25x1024xf32, #tpu.memory_space<vmem>>, vector<4x4xf32>
    %c21 = arith.constant 21 : index
    %c0_5 = arith.constant 0 : index
    %7 = vector.load %arg1[%c21, %c0_5] : memref<25x1024xf32, #tpu.memory_space<vmem>>, vector<1x4xf32>
    %8 = vector.extract_strided_slice %5 {offsets = [0, 0], sizes = [2, 1], strides = [1, 1]} : vector<2x4xf32> to vector<2x1xf32>
    %9 = vector.extract_strided_slice %6 {offsets = [0, 0], sizes = [1, 4], strides = [1, 1]} : vector<4x4xf32> to vector<1x4xf32>
    %10 = vector.broadcast %8 : vector<2x1xf32> to vector<2x4xf32>
    %11 = vector.broadcast %9 : vector<1x4xf32> to vector<2x4xf32>
    %12 = arith.mulf %10, %11 : vector<2x4xf32>
    %13 = vector.broadcast %7 : vector<1x4xf32> to vector<2x4xf32>
    %14 = arith.addf %13, %12 : vector<2x4xf32>
    %15 = vector.extract_strided_slice %5 {offsets = [0, 1], sizes = [2, 1], strides = [1, 1]} : vector<2x4xf32> to vector<2x1xf32>
    %16 = vector.extract_strided_slice %6 {offsets = [1, 0], sizes = [1, 4], strides = [1, 1]} : vector<4x4xf32> to vector<1x4xf32>
    %17 = vector.broadcast %15 : vector<2x1xf32> to vector<2x4xf32>
    %18 = vector.broadcast %16 : vector<1x4xf32> to vector<2x4xf32>
    %19 = arith.mulf %17, %18 : vector<2x4xf32>
    %20 = arith.addf %14, %19 : vector<2x4xf32>
    %21 = vector.extract_strided_slice %5 {offsets = [0, 2], sizes = [2, 1], strides = [1, 1]} : vector<2x4xf32> to vector<2x1xf32>
    %22 = vector.extract_strided_slice %6 {offsets = [2, 0], sizes = [1, 4], strides = [1, 1]} : vector<4x4xf32> to vector<1x4xf32>
    %23 = vector.broadcast %21 : vector<2x1xf32> to vector<2x4xf32>
    %24 = vector.broadcast %22 : vector<1x4xf32> to vector<2x4xf32>
    %25 = arith.mulf %23, %24 : vector<2x4xf32>
    %26 = arith.addf %20, %25 : vector<2x4xf32>
    %27 = vector.extract_strided_slice %5 {offsets = [0, 3], sizes = [2, 1], strides = [1, 1]} : vector<2x4xf32> to vector<2x1xf32>
    %28 = vector.extract_strided_slice %6 {offsets = [3, 0], sizes = [1, 4], strides = [1, 1]} : vector<4x4xf32> to vector<1x4xf32>
    %29 = vector.broadcast %27 : vector<2x1xf32> to vector<2x4xf32>
    %30 = vector.broadcast %28 : vector<1x4xf32> to vector<2x4xf32>
    %31 = arith.mulf %29, %30 : vector<2x4xf32>
    %32 = arith.addf %26, %31 : vector<2x4xf32>
    %cst_6 = arith.constant 0.000000e+00 : f32
    %33 = vector.broadcast %cst_6 : f32 to vector<2x4xf32>
    %34 = arith.cmpf ogt, %32, %33 : vector<2x4xf32>
    %cst_7 = arith.constant 2.000000e-01 : f32
    %35 = vector.broadcast %cst_7 : f32 to vector<2x4xf32>
    %36 = arith.mulf %35, %32 : vector<2x4xf32>
    %37 = arith.select %34, %32, %36 : vector<2x4xi1>, vector<2x4xf32>
    %c8 = arith.constant 8 : index
    %c0_8 = arith.constant 0 : index
    %38 = vector.load %arg1[%c8, %c0_8] : memref<25x1024xf32, #tpu.memory_space<vmem>>, vector<4x4xf32>
    %c22 = arith.constant 22 : index
    %c0_9 = arith.constant 0 : index
    %39 = vector.load %arg1[%c22, %c0_9] : memref<25x1024xf32, #tpu.memory_space<vmem>>, vector<1x4xf32>
    %40 = vector.extract_strided_slice %37 {offsets = [0, 0], sizes = [2, 1], strides = [1, 1]} : vector<2x4xf32> to vector<2x1xf32>
    %41 = vector.extract_strided_slice %38 {offsets = [0, 0], sizes = [1, 4], strides = [1, 1]} : vector<4x4xf32> to vector<1x4xf32>
    %42 = vector.broadcast %40 : vector<2x1xf32> to vector<2x4xf32>
    %43 = vector.broadcast %41 : vector<1x4xf32> to vector<2x4xf32>
    %44 = arith.mulf %42, %43 : vector<2x4xf32>
    %45 = vector.broadcast %39 : vector<1x4xf32> to vector<2x4xf32>
    %46 = arith.addf %45, %44 : vector<2x4xf32>
    %47 = vector.extract_strided_slice %37 {offsets = [0, 1], sizes = [2, 1], strides = [1, 1]} : vector<2x4xf32> to vector<2x1xf32>
    %48 = vector.extract_strided_slice %38 {offsets = [1, 0], sizes = [1, 4], strides = [1, 1]} : vector<4x4xf32> to vector<1x4xf32>
    %49 = vector.broadcast %47 : vector<2x1xf32> to vector<2x4xf32>
    %50 = vector.broadcast %48 : vector<1x4xf32> to vector<2x4xf32>
    %51 = arith.mulf %49, %50 : vector<2x4xf32>
    %52 = arith.addf %46, %51 : vector<2x4xf32>
    %53 = vector.extract_strided_slice %37 {offsets = [0, 2], sizes = [2, 1], strides = [1, 1]} : vector<2x4xf32> to vector<2x1xf32>
    %54 = vector.extract_strided_slice %38 {offsets = [2, 0], sizes = [1, 4], strides = [1, 1]} : vector<4x4xf32> to vector<1x4xf32>
    %55 = vector.broadcast %53 : vector<2x1xf32> to vector<2x4xf32>
    %56 = vector.broadcast %54 : vector<1x4xf32> to vector<2x4xf32>
    %57 = arith.mulf %55, %56 : vector<2x4xf32>
    %58 = arith.addf %52, %57 : vector<2x4xf32>
    %59 = vector.extract_strided_slice %37 {offsets = [0, 3], sizes = [2, 1], strides = [1, 1]} : vector<2x4xf32> to vector<2x1xf32>
    %60 = vector.extract_strided_slice %38 {offsets = [3, 0], sizes = [1, 4], strides = [1, 1]} : vector<4x4xf32> to vector<1x4xf32>
    %61 = vector.broadcast %59 : vector<2x1xf32> to vector<2x4xf32>
    %62 = vector.broadcast %60 : vector<1x4xf32> to vector<2x4xf32>
    %63 = arith.mulf %61, %62 : vector<2x4xf32>
    %64 = arith.addf %58, %63 : vector<2x4xf32>
    %cst_10 = arith.constant 0.000000e+00 : f32
    %65 = vector.broadcast %cst_10 : f32 to vector<2x4xf32>
    %66 = arith.cmpf ogt, %64, %65 : vector<2x4xf32>
    %cst_11 = arith.constant 2.000000e-01 : f32
    %67 = vector.broadcast %cst_11 : f32 to vector<2x4xf32>
    %68 = arith.mulf %67, %64 : vector<2x4xf32>
    %69 = arith.select %66, %64, %68 : vector<2x4xi1>, vector<2x4xf32>
    %c12 = arith.constant 12 : index
    %c0_12 = arith.constant 0 : index
    %70 = vector.load %arg1[%c12, %c0_12] : memref<25x1024xf32, #tpu.memory_space<vmem>>, vector<4x4xf32>
    %c23 = arith.constant 23 : index
    %c0_13 = arith.constant 0 : index
    %71 = vector.load %arg1[%c23, %c0_13] : memref<25x1024xf32, #tpu.memory_space<vmem>>, vector<1x4xf32>
    %72 = vector.extract_strided_slice %69 {offsets = [0, 0], sizes = [2, 1], strides = [1, 1]} : vector<2x4xf32> to vector<2x1xf32>
    %73 = vector.extract_strided_slice %70 {offsets = [0, 0], sizes = [1, 4], strides = [1, 1]} : vector<4x4xf32> to vector<1x4xf32>
    %74 = vector.broadcast %72 : vector<2x1xf32> to vector<2x4xf32>
    %75 = vector.broadcast %73 : vector<1x4xf32> to vector<2x4xf32>
    %76 = arith.mulf %74, %75 : vector<2x4xf32>
    %77 = vector.broadcast %71 : vector<1x4xf32> to vector<2x4xf32>
    %78 = arith.addf %77, %76 : vector<2x4xf32>
    %79 = vector.extract_strided_slice %69 {offsets = [0, 1], sizes = [2, 1], strides = [1, 1]} : vector<2x4xf32> to vector<2x1xf32>
    %80 = vector.extract_strided_slice %70 {offsets = [1, 0], sizes = [1, 4], strides = [1, 1]} : vector<4x4xf32> to vector<1x4xf32>
    %81 = vector.broadcast %79 : vector<2x1xf32> to vector<2x4xf32>
    %82 = vector.broadcast %80 : vector<1x4xf32> to vector<2x4xf32>
    %83 = arith.mulf %81, %82 : vector<2x4xf32>
    %84 = arith.addf %78, %83 : vector<2x4xf32>
    %85 = vector.extract_strided_slice %69 {offsets = [0, 2], sizes = [2, 1], strides = [1, 1]} : vector<2x4xf32> to vector<2x1xf32>
    %86 = vector.extract_strided_slice %70 {offsets = [2, 0], sizes = [1, 4], strides = [1, 1]} : vector<4x4xf32> to vector<1x4xf32>
    %87 = vector.broadcast %85 : vector<2x1xf32> to vector<2x4xf32>
    %88 = vector.broadcast %86 : vector<1x4xf32> to vector<2x4xf32>
    %89 = arith.mulf %87, %88 : vector<2x4xf32>
    %90 = arith.addf %84, %89 : vector<2x4xf32>
    %91 = vector.extract_strided_slice %69 {offsets = [0, 3], sizes = [2, 1], strides = [1, 1]} : vector<2x4xf32> to vector<2x1xf32>
    %92 = vector.extract_strided_slice %70 {offsets = [3, 0], sizes = [1, 4], strides = [1, 1]} : vector<4x4xf32> to vector<1x4xf32>
    %93 = vector.broadcast %91 : vector<2x1xf32> to vector<2x4xf32>
    %94 = vector.broadcast %92 : vector<1x4xf32> to vector<2x4xf32>
    %95 = arith.mulf %93, %94 : vector<2x4xf32>
    %96 = arith.addf %90, %95 : vector<2x4xf32>
    %cst_14 = arith.constant 0.000000e+00 : f32
    %97 = vector.broadcast %cst_14 : f32 to vector<2x4xf32>
    %98 = arith.cmpf ogt, %96, %97 : vector<2x4xf32>
    %cst_15 = arith.constant 2.000000e-01 : f32
    %99 = vector.broadcast %cst_15 : f32 to vector<2x4xf32>
    %100 = arith.mulf %99, %96 : vector<2x4xf32>
    %101 = arith.select %98, %96, %100 : vector<2x4xi1>, vector<2x4xf32>
    %c16 = arith.constant 16 : index
    %c0_16 = arith.constant 0 : index
    %102 = vector.load %arg1[%c16, %c0_16] : memref<25x1024xf32, #tpu.memory_space<vmem>>, vector<4x16xf32>
    %c24 = arith.constant 24 : index
    %c0_17 = arith.constant 0 : index
    %103 = vector.load %arg1[%c24, %c0_17] : memref<25x1024xf32, #tpu.memory_space<vmem>>, vector<1x16xf32>
    %104 = vector.extract_strided_slice %101 {offsets = [0, 0], sizes = [2, 1], strides = [1, 1]} : vector<2x4xf32> to vector<2x1xf32>
    %105 = vector.extract_strided_slice %102 {offsets = [0, 0], sizes = [1, 16], strides = [1, 1]} : vector<4x16xf32> to vector<1x16xf32>
    %106 = vector.broadcast %104 : vector<2x1xf32> to vector<2x16xf32>
    %107 = vector.broadcast %105 : vector<1x16xf32> to vector<2x16xf32>
    %108 = arith.mulf %106, %107 : vector<2x16xf32>
    %109 = vector.broadcast %103 : vector<1x16xf32> to vector<2x16xf32>
    %110 = arith.addf %109, %108 : vector<2x16xf32>
    %111 = vector.extract_strided_slice %101 {offsets = [0, 1], sizes = [2, 1], strides = [1, 1]} : vector<2x4xf32> to vector<2x1xf32>
    %112 = vector.extract_strided_slice %102 {offsets = [1, 0], sizes = [1, 16], strides = [1, 1]} : vector<4x16xf32> to vector<1x16xf32>
    %113 = vector.broadcast %111 : vector<2x1xf32> to vector<2x16xf32>
    %114 = vector.broadcast %112 : vector<1x16xf32> to vector<2x16xf32>
    %115 = arith.mulf %113, %114 : vector<2x16xf32>
    %116 = arith.addf %110, %115 : vector<2x16xf32>
    %117 = vector.extract_strided_slice %101 {offsets = [0, 2], sizes = [2, 1], strides = [1, 1]} : vector<2x4xf32> to vector<2x1xf32>
    %118 = vector.extract_strided_slice %102 {offsets = [2, 0], sizes = [1, 16], strides = [1, 1]} : vector<4x16xf32> to vector<1x16xf32>
    %119 = vector.broadcast %117 : vector<2x1xf32> to vector<2x16xf32>
    %120 = vector.broadcast %118 : vector<1x16xf32> to vector<2x16xf32>
    %121 = arith.mulf %119, %120 : vector<2x16xf32>
    %122 = arith.addf %116, %121 : vector<2x16xf32>
    %123 = vector.extract_strided_slice %101 {offsets = [0, 3], sizes = [2, 1], strides = [1, 1]} : vector<2x4xf32> to vector<2x1xf32>
    %124 = vector.extract_strided_slice %102 {offsets = [3, 0], sizes = [1, 16], strides = [1, 1]} : vector<4x16xf32> to vector<1x16xf32>
    %125 = vector.broadcast %123 : vector<2x1xf32> to vector<2x16xf32>
    %126 = vector.broadcast %124 : vector<1x16xf32> to vector<2x16xf32>
    %127 = arith.mulf %125, %126 : vector<2x16xf32>
    %128 = arith.addf %122, %127 : vector<2x16xf32>
    %129 = vector.extract_strided_slice %128 {offsets = [0, 0], sizes = [2, 8], strides = [1, 1]} : vector<2x16xf32> to vector<2x8xf32>
    %130 = vector.extract_strided_slice %128 {offsets = [0, 8], sizes = [2, 8], strides = [1, 1]} : vector<2x16xf32> to vector<2x8xf32>
    %c0_18 = arith.constant 0 : index
    %c0_19 = arith.constant 0 : index
    %131 = vector.load %arg2[%c0_18, %c0_19] : memref<2x8xf32, #tpu.memory_space<vmem>>, vector<2x8xf32>
    %cst_20 = arith.constant 5.000000e-01 : f32
    %132 = vector.broadcast %cst_20 : f32 to vector<2x8xf32>
    %133 = arith.mulf %132, %130 : vector<2x8xf32>
    %134 = math.exp %133 : vector<2x8xf32>
    %135 = arith.mulf %131, %134 : vector<2x8xf32>
    %136 = arith.addf %129, %135 : vector<2x8xf32>
    %c0_21 = arith.constant 0 : index
    %c0_22 = arith.constant 0 : index
    %137 = vector.load %arg3[%c0_21, %c0_22] : memref<2x24xf32, #tpu.memory_space<vmem>>, vector<2x16xf32>
    tpu.vector_store %arg3[%c0_21, %c0_22], %128 {strides = array<i32>} : memref<2x24xf32, #tpu.memory_space<vmem>>, vector<2x16xf32>,
    %c0_23 = arith.constant 0 : index
    %c16_24 = arith.constant 16 : index
    %138 = vector.load %arg3[%c0_23, %c16_24] : memref<2x24xf32, #tpu.memory_space<vmem>>, vector<2x8xf32>
    tpu.vector_store %arg3[%c0_23, %c16_24], %136 {strides = array<i32>} : memref<2x24xf32, #tpu.memory_space<vmem>>, vector<2x8xf32>,
    return
  }
}

</mosaic_0001>

<llo_original>
// kernel: tpu_custom_call.1
$region0: #{tpu_custom_call.1}
  #allocation0 [shape = 'u32[]', space=smem, size = 0x4, offset = 0x4, fixed_abs, tag = 'smem constant byte address 0x4 - core index']
  #allocation1 [shape = 'u32[72,128]{1,0:T(1,128)}', space=vmem, size = 0x9000, scoped, tag = 'internal scratch']
  %s0 = inlined_call_operand.hbm [shape: f32[2,1024], index: 0, kind: input, shape index: {}]
  %s1 = inlined_call_operand.hbm [shape: f32[25,1024], index: 1, kind: input, shape index: {}]
  %s2 = inlined_call_operand.hbm [shape: f32[2,8], index: 2, kind: input, shape index: {}]
  %s3 = inlined_call_operand.hbm [shape: f32[2,24], index: 3, kind: output, shape index: {}]
  %s4 = sld [smem:[#allocation0]]
  $region34: #{tpu_custom_call.1} parent=0
    _
  %s6 = ssub.s32 1, %s4
  %s7 = scalar_select 0, %s6, %s4
  $region1: #{tpu_custom_call.1} parent=0
    #allocation2 [shape = 'u8[8192]{0}', space=vmem, size = 0x2000, scoped, tag = 'input window, operand 0, single buffered']
    #allocation3 [shape = 's32[1]{0}', space=sflag, size = 0x4, scoped, tag = 'scoped memory for tpu_custom_call.1']
    #allocation4 [shape = 's32[1]{0}', space=sflag, size = 0x4, scoped, tag = 'scoped memory for tpu_custom_call.1']
    #allocation5 [shape = 'u8[131072]{0}', space=vmem, size = 0x20000, scoped, tag = 'input window, operand 1, single buffered']
    #allocation6 [shape = 's32[1]{0}', space=sflag, size = 0x4, scoped, tag = 'scoped memory for tpu_custom_call.1']
    #allocation7 [shape = 'u8[1024]{0}', space=vmem, size = 0x400, scoped, tag = 'input window, operand 2, single buffered']
    #allocation8 [shape = 'u8[1024]{0}', space=vmem, size = 0x400, scoped, tag = 'output window, operand 0, single buffered']
    %8 = vsyncpa [#allocation3], 0
    %9 = vsyncpa [#allocation6], 0
    %10 = vsyncpa [#allocation4], 0
    // Predicated region
    $region2: #{tpu_custom_call.1} parent=1 // pred_check
      _
    $region3: #{tpu_custom_call.1} parent=1 // pred_check_branch
      %12 = sbr.rel (0) target = $region5
    $region4: #{tpu_custom_call.1} parent=1 // pred_region
      %14 = vsyncadd [#allocation3], 0
      %s16 = sshll.u32 %s0, 4
      %s17 = int_to_ptr.hbm [resolvable:$true] %s16
      %s18 = sshll.u32 [#allocation2], 4
      %s19 = int_to_ptr.vmem [resolvable:$true] %s18
      %21 = dma.hbm_to_vmem [thread:$0]  %s17, 256, %s19, [#allocation3]
    $region5: #{tpu_custom_call.1} parent=1 // pred_fallthru
      _
    // Predicated region
    $region6: #{tpu_custom_call.1} parent=1 // pred_check
      _
    $region7: #{tpu_custom_call.1} parent=1 // pred_check_branch
      %23 = sbr.rel (0) target = $region9
    $region8: #{tpu_custom_call.1} parent=1 // pred_region
      %25 = vsyncadd [#allocation6], 0
      %s26 = sshll.u32 %s1, 4
      %s27 = int_to_ptr.hbm [resolvable:$true] %s26
      %s28 = sshll.u32 [#allocation5], 4
      %s29 = int_to_ptr.vmem [resolvable:$true] %s28
      %34 = dma.hbm_to_vmem [thread:$0]  %s27, 4096, %s29, [#allocation6], 1024, 1024, 64
    $region9: #{tpu_custom_call.1} parent=1 // pred_fallthru
      _
    // Predicated region
    $region10: #{tpu_custom_call.1} parent=1 // pred_check
      _
    $region11: #{tpu_custom_call.1} parent=1 // pred_check_branch
      %36 = sbr.rel (0) target = $region13
    $region12: #{tpu_custom_call.1} parent=1 // pred_region
      %38 = vsyncadd [#allocation6], 0
      %s40 = sshll.u32 %s2, 4
      %s41 = int_to_ptr.hbm [resolvable:$true] %s40
      %s42 = sshll.u32 [#allocation7], 4
      %s43 = int_to_ptr.vmem [resolvable:$true] %s42
      %45 = dma.hbm_to_vmem [thread:$0]  %s41, 32, %s43, [#allocation6]
    $region13: #{tpu_custom_call.1} parent=1 // pred_fallthru
      _
    // Predicated region
    $region14: #{tpu_custom_call.1} parent=1 // pred_check
      _
    $region15: #{tpu_custom_call.1} parent=1 // pred_check_branch
      %47 = sbr.rel (0) target = $region17
    $region16: #{tpu_custom_call.1} parent=1 // pred_region
      %49 = dma.done [#allocation3], 256
    $region17: #{tpu_custom_call.1} parent=1 // pred_fallthru
      _
    // Predicated region
    $region18: #{tpu_custom_call.1} parent=1 // pred_check
      _
    $region19: #{tpu_custom_call.1} parent=1 // pred_check_branch
      %51 = sbr.rel (0) target = $region21
    $region20: #{tpu_custom_call.1} parent=1 // pred_region
      %53 = dma.done [#allocation6], 4096
    $region21: #{tpu_custom_call.1} parent=1 // pred_fallthru
      _
    // Predicated region
    $region22: #{tpu_custom_call.1} parent=1 // pred_check
      _
    $region23: #{tpu_custom_call.1} parent=1 // pred_check_branch
      %55 = sbr.rel (0) target = $region25
    $region24: #{tpu_custom_call.1} parent=1 // pred_region
      %57 = dma.done [#allocation6], 32
    $region25: #{tpu_custom_call.1} parent=1 // pred_fallthru
      _
    %v58 = vld [vmem:[#allocation2] sm:$0xff]
    %v59 = vld [vmem:[#allocation2 + $0x8] sm:$0xff]
    %v60 = vld [vmem:[#allocation5] sm:$0xf]
    %v61 = vld [vmem:[#allocation5 + $0x8] sm:$0xf]
    %v62 = vld [vmem:[#allocation5 + $0x10] sm:$0xf]
    %v63 = vld [vmem:[#allocation5 + $0x18] sm:$0xf]
    %v64 = vld [vmem:[#allocation5 + $0x20] sm:$0xf]
    %v65 = vld [vmem:[#allocation5 + $0x28] sm:$0xf]
    %v66 = vld [vmem:[#allocation5 + $0x30] sm:$0xf]
    %v67 = vld [vmem:[#allocation5 + $0x38] sm:$0xf]
    %v68 = vld [vmem:[#allocation5 + $0x84] ss:$0 sm:$0xff]
    %71 = vst [vmem:[#allocation1] ss:$4 sm:$0xff] %v58
    %s72 = scalar_lea.vmem [#allocation1], 32
    %73 = vst [vmem:[%s72] ss:$4 sm:$0xff] %v59
    %v74 = vld.sshfl [vmem:[#allocation1] sm:$0xff pattern:$0x73625140]
    %v75 = vld.sshfl [vmem:[#allocation1 + $0x8] sm:$0xff pattern:$0x73625140]
    %v76 = vld.sshfl [vmem:[#allocation1 + $0x10] sm:$0xff pattern:$0x73625140]
    %v77 = vld.sshfl [vmem:[#allocation1 + $0x18] sm:$0xff pattern:$0x73625140]
    %v78 = vld.sshfl [vmem:[#allocation1 + $0x20] sm:$0xff pattern:$0x73625140]
    %v79 = vld.sshfl [vmem:[#allocation1 + $0x28] sm:$0xff pattern:$0x73625140]
    %v80 = vld.sshfl [vmem:[#allocation1 + $0x30] sm:$0xff pattern:$0x73625140]
    %v81 = vld.sshfl [vmem:[#allocation1 + $0x38] sm:$0xff pattern:$0x73625140]
    %90 = vmatpush.xpose.msra.mxu0 0.0
    %91 = vmatpush.xpose.msra.mxu0 0.0
    %92 = vmatpush.xpose.msra.mxu0 0.0
    %93 = vmatpush.xpose.msra.mxu0 0.0
    %94 = vmatpush.xpose.msra.mxu0 0.0
    %95 = vmatpush.xpose.msra.mxu0 0.0
    %96 = vmatpush.xpose.msra.mxu0 0.0
    %97 = vmatpush.xpose.msra.mxu0 0.0
    %98 = vmatpush.xpose.msra.mxu0 0.0
    %99 = vmatpush.xpose.msra.mxu0 0.0
    %100 = vmatpush.xpose.msra.mxu0 0.0
    %101 = vmatpush.xpose.msra.mxu0 0.0
    %102 = vmatpush.xpose.msra.mxu0 0.0
    %103 = vmatpush.xpose.msra.mxu0 0.0
    %104 = vmatpush.xpose.msra.mxu0 0.0
    %105 = vmatpush.xpose.msra.mxu0 %v60
    %106 = vmatmul.f32.gmra.mxu0 %v74
    %v107 = vpop.f32.mrf.mxu0
    %v108 = vadd.f32 %v68, %v107
    %109 = vdwg.mxu0
    %110 = vmatpush.xpose.msra.mxu0 0.0
    %111 = vmatpush.xpose.msra.mxu0 0.0
    %112 = vmatpush.xpose.msra.mxu0 0.0
    %113 = vmatpush.xpose.msra.mxu0 0.0
    %114 = vmatpush.xpose.msra.mxu0 0.0
    %115 = vmatpush.xpose.msra.mxu0 0.0
    %116 = vmatpush.xpose.msra.mxu0 0.0
    %117 = vmatpush.xpose.msra.mxu0 0.0
    %118 = vmatpush.xpose.msra.mxu0 0.0
    %119 = vmatpush.xpose.msra.mxu0 0.0
    %120 = vmatpush.xpose.msra.mxu0 0.0
    %121 = vmatpush.xpose.msra.mxu0 0.0
    %122 = vmatpush.xpose.msra.mxu0 0.0
    %123 = vmatpush.xpose.msra.mxu0 0.0
    %124 = vmatpush.xpose.msra.mxu0 0.0
    %125 = vmatpush.xpose.msra.mxu0 %v61
    %126 = vmatmul.f32.gmra.mxu0 %v75
    %v127 = vpop.f32.mrf.mxu0
    %v128 = vadd.f32 %v108, %v127
    %129 = vdwg.mxu0
    %130 = vmatpush.xpose.msra.mxu0 0.0
    %131 = vmatpush.xpose.msra.mxu0 0.0
    %132 = vmatpush.xpose.msra.mxu0 0.0
    %133 = vmatpush.xpose.msra.mxu0 0.0
    %134 = vmatpush.xpose.msra.mxu0 0.0
    %135 = vmatpush.xpose.msra.mxu0 0.0
    %136 = vmatpush.xpose.msra.mxu0 0.0
    %137 = vmatpush.xpose.msra.mxu0 0.0
    %138 = vmatpush.xpose.msra.mxu0 0.0
    %139 = vmatpush.xpose.msra.mxu0 0.0
    %140 = vmatpush.xpose.msra.mxu0 0.0
    %141 = vmatpush.xpose.msra.mxu0 0.0
    %142 = vmatpush.xpose.msra.mxu0 0.0
    %143 = vmatpush.xpose.msra.mxu0 0.0
    %144 = vmatpush.xpose.msra.mxu0 0.0
    %145 = vmatpush.xpose.msra.mxu0 %v62
    %146 = vmatmul.f32.gmra.mxu0 %v76
    %v147 = vpop.f32.mrf.mxu0
    %v148 = vadd.f32 %v128, %v147
    %149 = vdwg.mxu0
    %150 = vmatpush.xpose.msra.mxu0 0.0
    %151 = vmatpush.xpose.msra.mxu0 0.0
    %152 = vmatpush.xpose.msra.mxu0 0.0
    %153 = vmatpush.xpose.msra.mxu0 0.0
    %154 = vmatpush.xpose.msra.mxu0 0.0
    %155 = vmatpush.xpose.msra.mxu0 0.0
    %156 = vmatpush.xpose.msra.mxu0 0.0
    %157 = vmatpush.xpose.msra.mxu0 0.0
    %158 = vmatpush.xpose.msra.mxu0 0.0
    %159 = vmatpush.xpose.msra.mxu0 0.0
    %160 = vmatpush.xpose.msra.mxu0 0.0
    %161 = vmatpush.xpose.msra.mxu0 0.0
    %162 = vmatpush.xpose.msra.mxu0 0.0
    %163 = vmatpush.xpose.msra.mxu0 0.0
    %164 = vmatpush.xpose.msra.mxu0 0.0
    %165 = vmatpush.xpose.msra.mxu0 %v63
    %166 = vmatmul.f32.gmra.mxu0 %v77
    %v167 = vpop.f32.mrf.mxu0
    %v168 = vadd.f32 %v148, %v167
    %169 = vdwg.mxu0
    %170 = vmatpush.xpose.msra.mxu0 0.0
    %171 = vmatpush.xpose.msra.mxu0 0.0
    %172 = vmatpush.xpose.msra.mxu0 0.0
    %173 = vmatpush.xpose.msra.mxu0 0.0
    %174 = vmatpush.xpose.msra.mxu0 0.0
    %175 = vmatpush.xpose.msra.mxu0 0.0
    %176 = vmatpush.xpose.msra.mxu0 0.0
    %177 = vmatpush.xpose.msra.mxu0 0.0
    %178 = vmatpush.xpose.msra.mxu0 0.0
    %179 = vmatpush.xpose.msra.mxu0 0.0
    %180 = vmatpush.xpose.msra.mxu0 0.0
    %181 = vmatpush.xpose.msra.mxu0 0.0
    %182 = vmatpush.xpose.msra.mxu0 0.0
    %183 = vmatpush.xpose.msra.mxu0 0.0
    %184 = vmatpush.xpose.msra.mxu0 0.0
    %185 = vmatpush.xpose.msra.mxu0 %v64
    %186 = vmatmul.f32.gmra.mxu0 %v78
    %v187 = vpop.f32.mrf.mxu0
    %v188 = vadd.f32 %v168, %v187
    %189 = vdwg.mxu0
    %190 = vmatpush.xpose.msra.mxu0 0.0
    %191 = vmatpush.xpose.msra.mxu0 0.0
    %192 = vmatpush.xpose.msra.mxu0 0.0
    %193 = vmatpush.xpose.msra.mxu0 0.0
    %194 = vmatpush.xpose.msra.mxu0 0.0
    %195 = vmatpush.xpose.msra.mxu0 0.0
    %196 = vmatpush.xpose.msra.mxu0 0.0
    %197 = vmatpush.xpose.msra.mxu0 0.0
    %198 = vmatpush.xpose.msra.mxu0 0.0
    %199 = vmatpush.xpose.msra.mxu0 0.0
    %200 = vmatpush.xpose.msra.mxu0 0.0
    %201 = vmatpush.xpose.msra.mxu0 0.0
    %202 = vmatpush.xpose.msra.mxu0 0.0
    %203 = vmatpush.xpose.msra.mxu0 0.0
    %204 = vmatpush.xpose.msra.mxu0 0.0
    %205 = vmatpush.xpose.msra.mxu0 %v65
    %206 = vmatmul.f32.gmra.mxu0 %v79
    %v207 = vpop.f32.mrf.mxu0
    %v208 = vadd.f32 %v188, %v207
    %209 = vdwg.mxu0
    %210 = vmatpush.xpose.msra.mxu0 0.0
    %211 = vmatpush.xpose.msra.mxu0 0.0
    %212 = vmatpush.xpose.msra.mxu0 0.0
    %213 = vmatpush.xpose.msra.mxu0 0.0
    %214 = vmatpush.xpose.msra.mxu0 0.0
    %215 = vmatpush.xpose.msra.mxu0 0.0
    %216 = vmatpush.xpose.msra.mxu0 0.0
    %217 = vmatpush.xpose.msra.mxu0 0.0
    %218 = vmatpush.xpose.msra.mxu0 0.0
    %219 = vmatpush.xpose.msra.mxu0 0.0
    %220 = vmatpush.xpose.msra.mxu0 0.0
    %221 = vmatpush.xpose.msra.mxu0 0.0
    %222 = vmatpush.xpose.msra.mxu0 0.0
    %223 = vmatpush.xpose.msra.mxu0 0.0
    %224 = vmatpush.xpose.msra.mxu0 0.0
    %225 = vmatpush.xpose.msra.mxu0 %v66
    %226 = vmatmul.f32.gmra.mxu0 %v80
    %v227 = vpop.f32.mrf.mxu0
    %v228 = vadd.f32 %v208, %v227
    %229 = vdwg.mxu0
    %230 = vmatpush.xpose.msra.mxu0 0.0
    %231 = vmatpush.xpose.msra.mxu0 0.0
    %232 = vmatpush.xpose.msra.mxu0 0.0
    %233 = vmatpush.xpose.msra.mxu0 0.0
    %234 = vmatpush.xpose.msra.mxu0 0.0
    %235 = vmatpush.xpose.msra.mxu0 0.0
    %236 = vmatpush.xpose.msra.mxu0 0.0
    %237 = vmatpush.xpose.msra.mxu0 0.0
    %238 = vmatpush.xpose.msra.mxu0 0.0
    %239 = vmatpush.xpose.msra.mxu0 0.0
    %240 = vmatpush.xpose.msra.mxu0 0.0
    %241 = vmatpush.xpose.msra.mxu0 0.0
    %242 = vmatpush.xpose.msra.mxu0 0.0
    %243 = vmatpush.xpose.msra.mxu0 0.0
    %244 = vmatpush.xpose.msra.mxu0 0.0
    %245 = vmatpush.xpose.msra.mxu0 %v67
    %246 = vmatmul.f32.gmra.mxu0 %v81
    %v247 = vpop.f32.mrf.mxu0
    %v248 = vadd.f32 %v228, %v247
    %249 = vdwg.mxu0
    %v250 = vld [vmem:[#allocation5] sm:$0xf0]
    %v251 = vld [vmem:[#allocation5 + $0x85] ss:$0 sm:$0xff]
    %253 = vset.pattern.permute.xlu0 0
    %254 = vperm.xlu0 %253, %v248
    %v255 = vpop.permute.xlu0 %254
    %v257 = vperm.slane %v250, 4
    %v258 = vmul.f32 %v255, %v257
    %v259 = vadd.f32 %v251, %v258
    %260 = vset.pattern.permute.xlu0 1
    %261 = vperm.xlu0 %260, %v248
    %v262 = vpop.permute.xlu0 %261
    %v264 = vperm.slane %v250, 5
    %v265 = vmul.f32 %v262, %v264
    %v266 = vadd.f32 %v259, %v265
    %267 = vset.pattern.permute.xlu0 2
    %268 = vperm.xlu0 %267, %v248
    %v269 = vpop.permute.xlu0 %268
    %v271 = vperm.slane %v250, 6
    %v272 = vmul.f32 %v269, %v271
    %v273 = vadd.f32 %v266, %v272
    %274 = vset.pattern.permute.xlu0 3
    %275 = vperm.xlu0 %274, %v248
    %v276 = vpop.permute.xlu0 %275
    %v278 = vperm.slane %v250, 7
    %v279 = vmul.f32 %v276, %v278
    %v280 = vadd.f32 %v273, %v279
    %vm281 = vcmp.gt.f32.partialorder %v280, 0.0
    %v282 = vmul.f32 %v280, 0.2
    %v283 = vsel %vm281, %v280, %v282
    %v284 = vld [vmem:[#allocation5 + $0x40] sm:$0xf]
    %v285 = vld [vmem:[#allocation5 + $0x86] ss:$0 sm:$0xff]
    %287 = vset.pattern.permute.xlu0 0
    %288 = vperm.xlu0 %287, %v283
    %v289 = vpop.permute.xlu0 %288
    %v291 = vperm.slane %v284, 0
    %v292 = vmul.f32 %v289, %v291
    %v293 = vadd.f32 %v285, %v292
    %294 = vset.pattern.permute.xlu0 1
    %295 = vperm.xlu0 %294, %v283
    %v296 = vpop.permute.xlu0 %295
    %v298 = vperm.slane %v284, 1
    %v299 = vmul.f32 %v296, %v298
    %v300 = vadd.f32 %v293, %v299
    %301 = vset.pattern.permute.xlu0 2
    %302 = vperm.xlu0 %301, %v283
    %v303 = vpop.permute.xlu0 %302
    %v305 = vperm.slane %v284, 2
    %v306 = vmul.f32 %v303, %v305
    %v307 = vadd.f32 %v300, %v306
    %308 = vset.pattern.permute.xlu0 3
    %309 = vperm.xlu0 %308, %v283
    %v310 = vpop.permute.xlu0 %309
    %v312 = vperm.slane %v284, 3
    %v313 = vmul.f32 %v310, %v312
    %v314 = vadd.f32 %v307, %v313
    %vm315 = vcmp.gt.f32.partialorder %v314, 0.0
    %v316 = vmul.f32 %v314, 0.2
    %v317 = vsel %vm315, %v314, %v316
    %v318 = vld [vmem:[#allocation5 + $0x40] sm:$0xf0]
    %v319 = vld [vmem:[#allocation5 + $0x87] ss:$0 sm:$0xff]
    %321 = vset.pattern.permute.xlu0 0
    %322 = vperm.xlu0 %321, %v317
    %v323 = vpop.permute.xlu0 %322
    %v325 = vperm.slane %v318, 4
    %v326 = vmul.f32 %v323, %v325
    %v327 = vadd.f32 %v319, %v326
    %328 = vset.pattern.permute.xlu0 1
    %329 = vperm.xlu0 %328, %v317
    %v330 = vpop.permute.xlu0 %329
    %v332 = vperm.slane %v318, 5
    %v333 = vmul.f32 %v330, %v332
    %v334 = vadd.f32 %v327, %v333
    %335 = vset.pattern.permute.xlu0 2
    %336 = vperm.xlu0 %335, %v317
    %v337 = vpop.permute.xlu0 %336
    %v339 = vperm.slane %v318, 6
    %v340 = vmul.f32 %v337, %v339
    %v341 = vadd.f32 %v334, %v340
    %342 = vset.pattern.permute.xlu0 3
    %343 = vperm.xlu0 %342, %v317
    %v344 = vpop.permute.xlu0 %343
    %v346 = vperm.slane %v318, 7
    %v347 = vmul.f32 %v344, %v346
    %v348 = vadd.f32 %v341, %v347
    %vm349 = vcmp.gt.f32.partialorder %v348, 0.0
    %v350 = vmul.f32 %v348, 0.2
    %v351 = vsel %vm349, %v348, %v350
    %v352 = vld [vmem:[#allocation5 + $0x80] sm:$0xf]
    %v353 = vld [vmem:[#allocation5 + $0xc0] ss:$0 sm:$0xff]
    %355 = vset.pattern.permute.xlu0 0
    %356 = vperm.xlu0 %355, %v351
    %v357 = vpop.permute.xlu0 %356
    %v359 = vperm.slane %v352, 0
    %v360 = vmul.f32 %v357, %v359
    %v361 = vadd.f32 %v353, %v360
    %362 = vset.pattern.permute.xlu0 1
    %363 = vperm.xlu0 %362, %v351
    %v364 = vpop.permute.xlu0 %363
    %v366 = vperm.slane %v352, 1
    %v367 = vmul.f32 %v364, %v366
    %v368 = vadd.f32 %v361, %v367
    %369 = vset.pattern.permute.xlu0 2
    %370 = vperm.xlu0 %369, %v351
    %v371 = vpop.permute.xlu0 %370
    %v373 = vperm.slane %v352, 2
    %v374 = vmul.f32 %v371, %v373
    %v375 = vadd.f32 %v368, %v374
    %376 = vset.pattern.permute.xlu0 3
    %377 = vperm.xlu0 %376, %v351
    %v378 = vpop.permute.xlu0 %377
    %v380 = vperm.slane %v352, 3
    %v381 = vmul.f32 %v378, %v380
    %v382 = vadd.f32 %v375, %v381
    %v383 = vld [vmem:[#allocation7] sm:$0x3]
    %v384 = vmul.f32 %v382, 0.5
    %v385 = vmul.f32 %v384, 1.442695
    %v386 = vpow.pop %v385
    %388 = vrot.lane.b32.xlu0 %v386, 120
    %v389 = vpop.permute.xlu0 %388
    %v391 = vmul.f32 %v383, %v389
    %v392 = vadd.f32 %v382, %v391
    %vm393 = vcmask 123904
    %394 = vst.msk [vmem:[#allocation8] sm:$0x3] %vm393, %v382
    %396 = vrot.lane.b32.xlu0 %v392, 16
    %v397 = vpop.permute.xlu0 %396
    %vm399 = vcmask 189568
    %400 = vst.msk [vmem:[#allocation8] sm:$0x3] %vm399, %v397
    // Predicated region
    $region26: #{tpu_custom_call.1} parent=1 // pred_check
      _
    $region27: #{tpu_custom_call.1} parent=1 // pred_check_branch
      %402 = sbr.rel (0) target = $region29
    $region28: #{tpu_custom_call.1} parent=1 // pred_region
      %404 = vsyncadd [#allocation4], 0
      %s406 = sshll.u32 [#allocation8], 4
      %s407 = int_to_ptr.vmem [resolvable:$true] %s406
      %s408 = sshll.u32 %s3, 4
      %s409 = int_to_ptr.hbm [resolvable:$true] %s408
      %411 = dma.vmem_to_hbm [thread:$0]  %s407, 32, %s409, [#allocation4]
    $region29: #{tpu_custom_call.1} parent=1 // pred_fallthru
      _
    // Predicated region
    $region30: #{tpu_custom_call.1} parent=1 // pred_check
      _
    $region31: #{tpu_custom_call.1} parent=1 // pred_check_branch
      %413 = sbr.rel (0) target = $region33
    $region32: #{tpu_custom_call.1} parent=1 // pred_region
      %415 = dma.done [#allocation4], 32
    $region33: #{tpu_custom_call.1} parent=1 // pred_fallthru
      _
    %416 = vsyncpa [#allocation3], 1
    %417 = vsyncpa [#allocation6], 1
    %418 = vsyncpa [#allocation4], 1

</llo_original>
